<compile_context>
chip_gen: v7x
topology: tpu7x:2x2x1
jax: 0.10.0
libtpu: 0.0.40
codegen_flags: <defaults>
</compile_context>

<pallas_src>
import jax
import jax.numpy as jnp
from jax.experimental import pallas as pl
from jax.experimental.pallas import tpu as pltpu

_LANE = 128
_VMEM_LIMIT = 32 * 1024 * 1024               # explicit raise (v5e default is 16 MiB)
_TARGET_HALF_BLOCK_BYTES = 4 * 1024 * 1024   # per-half ("per operand") block target
_MIN_STEP_HALF_BYTES = 512 * 1024            # don't shrink pipeline steps below this
_MIN_GRID_STEPS = 8                          # desired pipeline depth / megacore work
_FALLBACK_VMEM_BUDGET = 16 * 1024 * 1024     # conservative: 1-row blocks pad 8x


def _glu_kernel(x_in_ref, x_gate_ref, o_ref):
    # f32 math: exp/recip run on the EUP; correct on v5e (no bf16 VPU/EUP) and
    # free on v6e/v7x because the kernel is HBM-bound.
    x_in = x_in_ref[...].astype(jnp.float32)
    gate = jax.nn.sigmoid(x_gate_ref[...].astype(jnp.float32))
    o_ref[...] = (x_in * gate).astype(o_ref.dtype)


def _cost(n_out, itemsize):
    # ~4 flops/elem (sigmoid + mul), 1 exp/elem, read 2 halves + write 1.
    return pl.CostEstimate(flops=4 * n_out, transcendentals=n_out,
                           bytes_accessed=3 * n_out * itemsize)


def _plan_blocks(outer, rows, itemsize):
    """Pick (bo, br) for lane-dense (bo, 1, br, 128) blocks under a cdiv grid."""
    row_bytes = _LANE * itemsize
    sub = 8 * max(1, 4 // itemsize)          # sublane granularity (8 f32, 16 bf16, ...)
    target_rows = max(sub, (_TARGET_HALF_BLOCK_BYTES // row_bytes) // sub * sub)

    if rows <= target_rows:
        br = rows                             # full row extent of a half: always legal
    else:
        br = target_rows                      # multiple of `sub`; cdiv grid takes the tail

    bo = 1
    if br == rows:
        # One block already covers all rows of a half: grow it across `outer`
        # toward the per-half byte target.
        bo = max(1, min(outer, _TARGET_HALF_BLOCK_BYTES // max(1, rows * row_bytes)))

    # Don't let a MiB-scale tensor collapse into a 1-2 step grid: that would
    # serialize input-DMA -> compute -> output-DMA and idle one v7x TensorCore.
    def n_steps(bo_, br_):
        return pl.cdiv(outer, bo_) * pl.cdiv(rows, br_)

    while n_steps(bo, br) < _MIN_GRID_STEPS:
        if bo * br * row_bytes < 2 * _MIN_STEP_HALF_BYTES:
            break                             # tiny tensor: splitting buys nothing
        if bo > 1:
            bo = (bo + 1) // 2
        elif br > sub:
            br = max(sub, (br // 2) // sub * sub)
        else:
            break
    return bo, br


def _glu_nocopy(x, outer, half, inner, out_shape):
    """Main zero-copy path: read both halves straight from x via offset index_maps."""
    dtype = x.dtype
    itemsize = jnp.dtype(dtype).itemsize
    n_half = half * inner                     # multiple of _LANE (checked by caller)
    rows = n_half // _LANE

    # rows < 8 can't be folded into >=8 sublanes without a copy (per-half < 1024
    # elems); the full-extent (rows, 128) block is legal and the tensor is tiny,
    # so masked partial stores are irrelevant there.
    bo, br = _plan_blocks(outer, rows, itemsize)
    x4 = x.reshape(outer, 2, rows, _LANE)     # free collapse, no data movement
    grid = (pl.cdiv(outer, bo), pl.cdiv(rows, br))
    blk = (bo, 1, br, _LANE)

    in_spec = pl.BlockSpec(blk, lambda o, r: (o, 0, r, 0))     # first half
    gate_spec = pl.BlockSpec(blk, lambda o, r: (o, 1, r, 0))   # second half (offset)
    out_spec = pl.BlockSpec(blk, lambda o, r: (o, 0, r, 0))

    out = pl.pallas_call(
        _glu_kernel,
        out_shape=jax.ShapeDtypeStruct((outer, 1, rows, _LANE), dtype),
        grid_spec=pltpu.PrefetchScalarGridSpec(
            num_scalar_prefetch=0,
            grid=grid,
            in_specs=[in_spec, gate_spec],
            out_specs=out_spec),
        compiler_params=pltpu.CompilerParams(
            dimension_semantics=("parallel", "parallel"),
            vmem_limit_bytes=_VMEM_LIMIT),
        cost_estimate=_cost(outer * n_half, itemsize),
    )(x4, x4)
    return out.reshape(out_shape)


def _glu_fallback(x, outer, half, inner, out_shape):
    """Zero-copy path for per-half sizes that are NOT a multiple of 128.

    x is viewed as (outer, 2, 1, n_half).  The last two block dims are either
    the full (1, n_half) extent or (1, k*128) with a masked cdiv tail - both
    legal.  The 1-row layout is sublane-padded ~8x in VMEM, so block sizing
    accounts for that; this still beats the old slice+pad fallback, which read
    and wrote the whole tensor in HBM an extra time before the kernel ran.
    """
    dtype = x.dtype
    itemsize = jnp.dtype(dtype).itemsize
    n_half = half * inner

    per_elem = 3 * 2 * 8 * itemsize           # in+gate+out, double-buffered, 8x pad
    max_elems = max(_LANE, _FALLBACK_VMEM_BUDGET // per_elem)
    if n_half <= max_elems:
        blk_l = n_half                         # full extent: legal for any size
    else:
        blk_l = max(_LANE, (max_elems // _LANE) * _LANE)   # 128-multiple, cdiv tail
    padded_l = -(-blk_l // _LANE) * _LANE
    bo = max(1, min(outer, max_elems // padded_l))

    x4 = x.reshape(outer, 2, 1, n_half)        # free collapse, no data movement
    grid = (pl.cdiv(outer, bo), pl.cdiv(n_half, blk_l))
    blk = (bo, 1, 1, blk_l)

    in_spec = pl.BlockSpec(blk, lambda o, l: (o, 0, 0, l))
    gate_spec = pl.BlockSpec(blk, lambda o, l: (o, 1, 0, l))
    out_spec = pl.BlockSpec(blk, lambda o, l: (o, 0, 0, l))

    out = pl.pallas_call(
        _glu_kernel,
        out_shape=jax.ShapeDtypeStruct((outer, 1, 1, n_half), dtype),
        grid_spec=pltpu.PrefetchScalarGridSpec(
            num_scalar_prefetch=0,
            grid=grid,
            in_specs=[in_spec, gate_spec],
            out_specs=out_spec),
        compiler_params=pltpu.CompilerParams(
            dimension_semantics=("parallel", "parallel"),
            vmem_limit_bytes=_VMEM_LIMIT),
        cost_estimate=_cost(outer * n_half, itemsize),
    )(x4, x4)
    return out.reshape(out_shape)


def glu(x, dim):
    """Matches torch: x_in, x_gate = x.chunk(2, dim); return x_in * sigmoid(x_gate)."""
    dim = dim % x.ndim
    C = x.shape[dim]
    if C % 2 != 0:
        raise ValueError("GLU split dim must have an even size")
    half = C // 2
    outer = 1
    for s in x.shape[:dim]:
        outer *= s
    inner = 1
    for s in x.shape[dim + 1:]:
        inner *= s
    out_shape = x.shape[:dim] + (half,) + x.shape[dim + 1:]

    if (half * inner) % _LANE == 0:
        return _glu_nocopy(x, outer, half, inner, out_shape)
    return _glu_fallback(x, outer, half, inner, out_shape)


if __name__ == "__main__":
    key = jax.random.PRNGKey(0)

    # NCHW input, chunked along channels (dim=1) -> zero-copy main path.
    x = jax.random.normal(key, (2, 8, 16, 16), dtype=jnp.float32)
    out = jax.block_until_ready(glu(x, 1))
    ref = (jax.lax.slice_in_dim(x, 0, 4, axis=1)
           * jax.nn.sigmoid(jax.lax.slice_in_dim(x, 4, 8, axis=1)))
    assert out.shape == ref.shape and out.dtype == ref.dtype
    assert jnp.allclose(out, ref, atol=1e-6, rtol=1e-6)

    # Odd spatial shape (per-half size not a multiple of 128) -> zero-copy fallback.
    x2 = jax.random.normal(jax.random.PRNGKey(1), (2, 6, 5, 5), dtype=jnp.float32)
    out2 = jax.block_until_ready(glu(x2, 1))
    ref2 = (jax.lax.slice_in_dim(x2, 0, 3, axis=1)
            * jax.nn.sigmoid(jax.lax.slice_in_dim(x2, 3, 6, axis=1)))
    assert out2.shape == ref2.shape
    assert jnp.allclose(out2, ref2, atol=1e-6, rtol=1e-6)

    # Split along the last dim (rows < 8 per half) -> main path, full-row block.
    x3 = jax.random.normal(jax.random.PRNGKey(2), (2, 8, 256), dtype=jnp.float32)
    out3 = jax.block_until_ready(glu(x3, -1))
    ref3 = x3[..., :128] * jax.nn.sigmoid(x3[..., 128:])
    assert out3.shape == ref3.shape
    assert jnp.allclose(out3, ref3, atol=1e-6, rtol=1e-6)

    print("KERNEL_OK")
</pallas_src>

<mosaic_0001>
module attributes {stable_mosaic.version = 11 : i64} {
  func.func @_glu_kernel(%arg0: i32, %arg1: i32, %arg2: memref<2x1x8x128xf32, #tpu.memory_space<vmem>>, %arg3: memref<2x1x8x128xf32, #tpu.memory_space<vmem>>, %arg4: memref<2x1x8x128xf32, #tpu.memory_space<vmem>>) attributes {dimension_semantics = [#tpu.dimension_semantics<parallel>, #tpu.dimension_semantics<parallel>], iteration_bounds = array<i64: 1, 1>, scalar_prefetch = 0 : i64, scratch_operands = 0 : i64, tpu.core_type = #tpu.core_type<tc>, window_params = [{transform_indices = @transform_0, window_bounds = array<i64: 2, 1, 8, 128>}, {transform_indices = @transform_1, window_bounds = array<i64: 2, 1, 8, 128>}, {transform_indices = @transform_2, window_bounds = array<i64: 2, 1, 8, 128>}]} {
    %c0 = arith.constant 0 : index
    %c0_0 = arith.constant 0 : index
    %c0_1 = arith.constant 0 : index
    %c0_2 = arith.constant 0 : index
    %0 = vector.load %arg2[%c0, %c0_0, %c0_1, %c0_2] : memref<2x1x8x128xf32, #tpu.memory_space<vmem>>, vector<2x1x8x128xf32>
    %c0_3 = arith.constant 0 : index
    %c0_4 = arith.constant 0 : index
    %c0_5 = arith.constant 0 : index
    %c0_6 = arith.constant 0 : index
    %1 = vector.load %arg3[%c0_3, %c0_4, %c0_5, %c0_6] : memref<2x1x8x128xf32, #tpu.memory_space<vmem>>, vector<2x1x8x128xf32>
    %2 = arith.negf %1 : vector<2x1x8x128xf32>
    %3 = math.exp %2 : vector<2x1x8x128xf32>
    %cst = arith.constant 1.000000e+00 : f32
    %4 = vector.broadcast %cst : f32 to vector<2x1x8x128xf32>
    %5 = arith.addf %4, %3 : vector<2x1x8x128xf32>
    %6 = arith.divf %4, %5 : vector<2x1x8x128xf32>
    %7 = arith.mulf %0, %6 : vector<2x1x8x128xf32>
    %c0_7 = arith.constant 0 : index
    %c0_8 = arith.constant 0 : index
    %c0_9 = arith.constant 0 : index
    %c0_10 = arith.constant 0 : index
    %8 = vector.load %arg4[%c0_7, %c0_8, %c0_9, %c0_10] : memref<2x1x8x128xf32, #tpu.memory_space<vmem>>, vector<2x1x8x128xf32>
    tpu.vector_store %arg4[%c0_7, %c0_8, %c0_9, %c0_10], %7 {strides = array<i32>} : memref<2x1x8x128xf32, #tpu.memory_space<vmem>>, vector<2x1x8x128xf32>,
    return
  }
  func.func @transform_0(%arg0: i32, %arg1: i32) -> (i32, i32, i32, i32) {
    %c0_i32 = arith.constant 0 : i32
    %c0_i32_0 = arith.constant 0 : i32
    %c0_i32_1 = arith.constant 0 : i32
    return %arg0, %c0_i32, %arg1, %c0_i32_0 : i32, i32, i32, i32
  }
  func.func @transform_1(%arg0: i32, %arg1: i32) -> (i32, i32, i32, i32) {
    %c1_i32 = arith.constant 1 : i32
    %c0_i32 = arith.constant 0 : i32
    %c0_i32_0 = arith.constant 0 : i32
    return %arg0, %c1_i32, %arg1, %c0_i32 : i32, i32, i32, i32
  }
  func.func @transform_2(%arg0: i32, %arg1: i32) -> (i32, i32, i32, i32) {
    %c0_i32 = arith.constant 0 : i32
    %c0_i32_0 = arith.constant 0 : i32
    %c0_i32_1 = arith.constant 0 : i32
    return %arg0, %c0_i32, %arg1, %c0_i32_0 : i32, i32, i32, i32
  }
}

</mosaic_0001>

<llo_original>
// kernel: tpu_custom_call.1
$region0: #{tpu_custom_call.1}
  #allocation0 [shape = 'u32[]', space=smem, size = 0x4, offset = 0x4, fixed_abs, tag = 'smem constant byte address 0x4 - core index']
  #allocation1 [shape = 'u32[144,128]{1,0:T(1,128)}', space=vmem, size = 0x12000, scoped, tag = 'internal scratch']
  %s0 = inlined_call_operand.hbm [shape: f32[2,2,8,128], index: 0, kind: input, shape index: {}]
  %s1 = inlined_call_operand.hbm [shape: f32[2,2,8,128], index: 1, kind: input, shape index: {}]
  %s2 = inlined_call_operand.hbm [shape: f32[2,1,8,128], index: 2, kind: output, shape index: {}]
  %s3 = sld [smem:[#allocation0]]
  $region26: #{tpu_custom_call.1} parent=0
    _
  %s5 = ssub.s32 1, %s3
  %s6 = scalar_select 0, %s5, %s3
  $region1: #{tpu_custom_call.1} parent=0
    #allocation2 [shape = 'u8[8192]{0}', space=vmem, size = 0x2000, scoped, tag = 'input window, operand 0, single buffered']
    #allocation3 [shape = 's32[1]{0}', space=sflag, size = 0x4, scoped, tag = 'scoped memory for tpu_custom_call.1']
    #allocation4 [shape = 's32[1]{0}', space=sflag, size = 0x4, scoped, tag = 'scoped memory for tpu_custom_call.1']
    #allocation5 [shape = 'u8[8192]{0}', space=vmem, size = 0x2000, scoped, tag = 'input window, operand 1, single buffered']
    #allocation6 [shape = 's32[1]{0}', space=sflag, size = 0x4, scoped, tag = 'scoped memory for tpu_custom_call.1']
    #allocation7 [shape = 'u8[8192]{0}', space=vmem, size = 0x2000, scoped, tag = 'output window, operand 0, single buffered']
    %7 = vsyncpa [#allocation3], 0
    %8 = vsyncpa [#allocation6], 0
    %9 = vsyncpa [#allocation4], 0
    // Predicated region
    $region2: #{tpu_custom_call.1} parent=1 // pred_check
      _
    $region3: #{tpu_custom_call.1} parent=1 // pred_check_branch
      %11 = sbr.rel (0) target = $region5
    $region4: #{tpu_custom_call.1} parent=1 // pred_region
      %s13 = ssub.s32 256, 256
      %14 = vsyncadd [#allocation3], %s13
      %s15 = sshll.u32 [#allocation2], 4
      %s16 = int_to_ptr.vmem [resolvable:$true] %s15
      %21 = dma.hbm_to_vmem [thread:$0]  %s0, 256, %s16, [#allocation3], 256, 128, 8
    $region5: #{tpu_custom_call.1} parent=1 // pred_fallthru
      _
    // Predicated region
    $region6: #{tpu_custom_call.1} parent=1 // pred_check
      _
    $region7: #{tpu_custom_call.1} parent=1 // pred_check_branch
      %23 = sbr.rel (0) target = $region9
    $region8: #{tpu_custom_call.1} parent=1 // pred_region
      %s25 = ssub.s32 256, 256
      %26 = vsyncadd [#allocation6], %s25
      %s27 = scalar_lea.hbm %s1, 128
      %s28 = sshll.u32 [#allocation5], 4
      %s29 = int_to_ptr.vmem [resolvable:$true] %s28
      %34 = dma.hbm_to_vmem [thread:$0]  %s27, 256, %s29, [#allocation6], 256, 128, 8
    $region9: #{tpu_custom_call.1} parent=1 // pred_fallthru
      _
    // Predicated region
    $region10: #{tpu_custom_call.1} parent=1 // pred_check
      _
    $region11: #{tpu_custom_call.1} parent=1 // pred_check_branch
      %36 = sbr.rel (0) target = $region13
    $region12: #{tpu_custom_call.1} parent=1 // pred_region
      %37 = dma.done [#allocation3], 256
    $region13: #{tpu_custom_call.1} parent=1 // pred_fallthru
      _
    // Predicated region
    $region14: #{tpu_custom_call.1} parent=1 // pred_check
      _
    $region15: #{tpu_custom_call.1} parent=1 // pred_check_branch
      %39 = sbr.rel (0) target = $region17
    $region16: #{tpu_custom_call.1} parent=1 // pred_region
      %40 = dma.done [#allocation6], 256
    $region17: #{tpu_custom_call.1} parent=1 // pred_fallthru
      _
    %v41 = vld [vmem:[#allocation2] sm:$0xff]
    %v42 = vld [vmem:[#allocation2 + $0x8] sm:$0xff]
    %v43 = vld [vmem:[#allocation5] sm:$0xff]
    %v44 = vld [vmem:[#allocation5 + $0x8] sm:$0xff]
    %v45 = vxor.u32 %v43, 2147483648
    %v46 = vxor.u32 %v44, 2147483648
    %v47 = vmul.f32 %v45, 1.442695
    %v48 = vpow.pop %v47
    %v49 = vmul.f32 %v46, 1.442695
    %v50 = vpow.pop %v49
    %v51 = vadd.f32 %v48, 1.0
    %v52 = vadd.f32 %v50, 1.0
    %v53 = vrcp.pop %v51
    %v54 = vmul.f32 1.0, %v53
    %v55 = vrcp.pop %v52
    %v56 = vmul.f32 1.0, %v55
    %v57 = vmul.f32 %v41, %v54
    %v58 = vmul.f32 %v42, %v56
    %59 = vst [vmem:[#allocation7] sm:$0xff] %v57
    %60 = vst [vmem:[#allocation7 + $0x8] sm:$0xff] %v58
    // Predicated region
    $region18: #{tpu_custom_call.1} parent=1 // pred_check
      _
    $region19: #{tpu_custom_call.1} parent=1 // pred_check_branch
      %62 = sbr.rel (0) target = $region21
    $region20: #{tpu_custom_call.1} parent=1 // pred_region
      %s64 = ssub.s32 256, 256
      %65 = vsyncadd [#allocation4], %s64
      %s66 = sshll.u32 [#allocation7], 4
      %s67 = int_to_ptr.vmem [resolvable:$true] %s66
      %72 = dma.vmem_to_hbm [thread:$0]  %s67, 256, %s2, [#allocation4], 128, 128, 8
    $region21: #{tpu_custom_call.1} parent=1 // pred_fallthru
      _
    // Predicated region
    $region22: #{tpu_custom_call.1} parent=1 // pred_check
      _
    $region23: #{tpu_custom_call.1} parent=1 // pred_check_branch
      %74 = sbr.rel (0) target = $region25
    $region24: #{tpu_custom_call.1} parent=1 // pred_region
      %75 = dma.done [#allocation4], 256
    $region25: #{tpu_custom_call.1} parent=1 // pred_fallthru
      _
    %76 = vsyncpa [#allocation3], 1
    %77 = vsyncpa [#allocation6], 1
    %78 = vsyncpa [#allocation4], 1

</llo_original>
